<compile_context>
chip_gen: v7x
topology: tpu7x:2x2x1
jax: 0.10.0
libtpu: 0.0.40
codegen_flags: <defaults>
</compile_context>

<pallas_src>
import functools

import jax
import jax.numpy as jnp
from jax.experimental import pallas as pl
from jax.experimental.pallas import tpu as pltpu

IN_FEATURES = 8 * 16   # 128
OUT_FEATURES = 8 * 16  # 128


def _round_up(x, m):
    return ((x + m - 1) // m) * m


def shiftrows_kernel(x_ref, wt_ref, b_ref, o_ref, *, compute_dtype=None):
    # x_ref: (TB, 128)  wt_ref: (128, 128) [in, out]  b_ref: (1, 128)  o_ref: (TB, 128)
    x = x_ref[...]
    if compute_dtype is not None:
        # In-kernel cast: hides under the MXU/DMA, avoids a separate XLA cast
        # pass over x in HBM.
        x = x.astype(compute_dtype)
    acc = jnp.dot(x, wt_ref[...], preferred_element_type=jnp.float32)
    o_ref[...] = (acc + b_ref[...].astype(jnp.float32)).astype(o_ref.dtype)


def shiftrows_forward(x, weight, bias, *, block_b=4096, compute_dtype=None):
    """Linear(128 -> 128):  out = x @ weight.T + bias.

    x:      (..., 128)
    weight: (128, 128)  PyTorch layout (out_features, in_features)
    bias:   (128,)
    compute_dtype: optional dtype (e.g. jnp.bfloat16) for the matmul operands;
                   accumulation stays f32 and the output keeps x.dtype.
    """
    orig_shape = x.shape
    assert orig_shape[-1] == IN_FEATURES
    x2d = x.reshape(-1, IN_FEATURES)
    B = x2d.shape[0]
    out_dtype = x.dtype

    # Batch tile: multiple of 8 (f32 sublane), capped by block_b, and capped so
    # the grid has >= 2 steps when B is large enough (v7x has 2 TensorCores).
    TB = max(8, min(block_b, _round_up(pl.cdiv(B, 2), 8)))
    grid = (pl.cdiv(B, TB),)  # ragged last block is clipped by Pallas — no padding.

    # Pre-transpose the (tiny, 64 KiB) weight once so the MXU sees M x K @ K x N.
    wt = weight.T                          # (in=128, out=128)
    bias2d = bias.reshape(1, OUT_FEATURES)
    if compute_dtype is not None:
        wt = wt.astype(compute_dtype)      # one-time, small; x is cast in-kernel.

    x_bytes = jnp.dtype(x2d.dtype).itemsize
    o_bytes = jnp.dtype(out_dtype).itemsize
    w_bytes = jnp.dtype(wt.dtype).itemsize

    # Double-buffered x + out tiles plus resident weight/bias.
    vmem_est = (2 * TB * IN_FEATURES * x_bytes
                + 2 * TB * OUT_FEATURES * o_bytes
                + IN_FEATURES * OUT_FEATURES * w_bytes
                + OUT_FEATURES * 4)
    vmem_limit = None
    if vmem_est > 12 * 1024 * 1024:        # only needed if block_b pushed past ~4096 at f32
        vmem_limit = min(vmem_est + (4 << 20), 60 << 20)

    cost = pl.CostEstimate(
        flops=2 * B * IN_FEATURES * OUT_FEATURES,
        transcendentals=0,
        bytes_accessed=(B * IN_FEATURES * x_bytes
                        + B * OUT_FEATURES * o_bytes
                        + IN_FEATURES * OUT_FEATURES * w_bytes
                        + OUT_FEATURES * 4),
    )

    kernel = functools.partial(shiftrows_kernel, compute_dtype=compute_dtype)

    out = pl.pallas_call(
        kernel,
        out_shape=jax.ShapeDtypeStruct((B, OUT_FEATURES), out_dtype),
        grid_spec=pltpu.PrefetchScalarGridSpec(
            num_scalar_prefetch=0,
            grid=grid,
            in_specs=[
                # x: streamed per batch tile (double-buffered by the pipeline).
                pl.BlockSpec((TB, IN_FEATURES), lambda i: (i, 0)),
                # weight / bias: constant block index -> VMEM-resident across tiles.
                pl.BlockSpec((IN_FEATURES, OUT_FEATURES), lambda i: (0, 0)),
                pl.BlockSpec((1, OUT_FEATURES), lambda i: (0, 0)),
            ],
            out_specs=pl.BlockSpec((TB, OUT_FEATURES), lambda i: (i, 0)),
        ),
        compiler_params=pltpu.CompilerParams(
            # Batch rows are independent: "parallel" lets v7x shard the grid
            # across both TensorCores; neutral on v5e/v6e.
            dimension_semantics=("parallel",),
            vmem_limit_bytes=vmem_limit,
        ),
        cost_estimate=cost,
    )(x2d, wt, bias2d)

    return out.reshape(orig_shape[:-1] + (OUT_FEATURES,))


if __name__ == "__main__":
    key = jax.random.PRNGKey(0)
    kx, kw, kb = jax.random.split(key, 3)

    batch = 8
    x = jax.random.normal(kx, (batch, IN_FEATURES), dtype=jnp.float32)

    # Deterministic parameter init (PyTorch Linear default: U(-1/sqrt(in), 1/sqrt(in)))
    bound = 1.0 / (IN_FEATURES ** 0.5)
    weight = jax.random.uniform(
        kw, (OUT_FEATURES, IN_FEATURES), dtype=jnp.float32, minval=-bound, maxval=bound
    )
    bias = jax.random.uniform(
        kb, (OUT_FEATURES,), dtype=jnp.float32, minval=-bound, maxval=bound
    )

    ref = x @ weight.T + bias

    # Default f32 path: matches the PyTorch module's numerics.
    out = shiftrows_forward(x, weight, bias)
    out = jax.block_until_ready(out)
    assert out.shape == (batch, OUT_FEATURES)
    assert jnp.allclose(out, ref, atol=1e-4, rtol=1e-4)

    # Ragged-batch path (no padding: last grid block is clipped by Pallas).
    xr = jax.random.normal(kx, (20, IN_FEATURES), dtype=jnp.float32)
    refr = xr @ weight.T + bias
    outr = jax.block_until_ready(shiftrows_forward(xr, weight, bias, block_b=16))
    assert outr.shape == (20, OUT_FEATURES)
    assert jnp.allclose(outr, refr, atol=1e-4, rtol=1e-4)

    # Optional bf16-operand path (MXU-native rate, f32 accumulation) — looser
    # tolerance since operand mantissa is reduced; cast happens inside the kernel.
    out_bf16 = shiftrows_forward(x, weight, bias, compute_dtype=jnp.bfloat16)
    out_bf16 = jax.block_until_ready(out_bf16)
    assert jnp.allclose(out_bf16, ref, atol=5e-2, rtol=5e-2)

    print("KERNEL_OK")
</pallas_src>

<mosaic_0001>
module attributes {stable_mosaic.version = 11 : i64} {
  func.func @shiftrows_kernel(%arg0: i32, %arg1: memref<8x128xf32, #tpu.memory_space<vmem>>, %arg2: memref<128x128xf32, #tpu.memory_space<vmem>>, %arg3: memref<1x128xf32, #tpu.memory_space<vmem>>, %arg4: memref<8x128xf32, #tpu.memory_space<vmem>>) attributes {dimension_semantics = [#tpu.dimension_semantics<parallel>], iteration_bounds = array<i64: 1>, scalar_prefetch = 0 : i64, scratch_operands = 0 : i64, tpu.core_type = #tpu.core_type<tc>, window_params = [{transform_indices = @transform_0, window_bounds = array<i64: 8, 128>}, {pipeline_mode = #tpu.pipeline_mode<synchronous>, transform_indices = @transform_1, window_bounds = array<i64: 128, 128>}, {pipeline_mode = #tpu.pipeline_mode<synchronous>, transform_indices = @transform_2, window_bounds = array<i64: 1, 128>}, {transform_indices = @transform_3, window_bounds = array<i64: 8, 128>}]} {
    %c0 = arith.constant 0 : index
    %c0_0 = arith.constant 0 : index
    %0 = vector.load %arg1[%c0, %c0_0] : memref<8x128xf32, #tpu.memory_space<vmem>>, vector<8x128xf32>
    %c0_1 = arith.constant 0 : index
    %c0_2 = arith.constant 0 : index
    %1 = vector.load %arg2[%c0_1, %c0_2] : memref<128x128xf32, #tpu.memory_space<vmem>>, vector<128x128xf32>
    %cst = arith.constant dense<0.000000e+00> : vector<8x128xf32>
    %2 = tpu.matmul %0, %1, %cst {dimension_numbers = #tpu.dot_dimension_numbers<[1], [0], [0], [1], [0, 0, 1, 1], [], []>} : vector<8x128xf32>, vector<128x128xf32>, vector<8x128xf32> -> vector<8x128xf32>
    %c0_3 = arith.constant 0 : index
    %c0_4 = arith.constant 0 : index
    %3 = vector.load %arg3[%c0_3, %c0_4] : memref<1x128xf32, #tpu.memory_space<vmem>>, vector<1x128xf32>
    %4 = vector.broadcast %3 : vector<1x128xf32> to vector<8x128xf32>
    %5 = arith.addf %2, %4 : vector<8x128xf32>
    %c0_5 = arith.constant 0 : index
    %c0_6 = arith.constant 0 : index
    %6 = vector.load %arg4[%c0_5, %c0_6] : memref<8x128xf32, #tpu.memory_space<vmem>>, vector<8x128xf32>
    tpu.vector_store %arg4[%c0_5, %c0_6], %5 {strides = array<i32>} : memref<8x128xf32, #tpu.memory_space<vmem>>, vector<8x128xf32>,
    return
  }
  func.func @transform_0(%arg0: i32) -> (i32, i32) {
    %c0_i32 = arith.constant 0 : i32
    %c0_i32_0 = arith.constant 0 : i32
    return %arg0, %c0_i32 : i32, i32
  }
  func.func @transform_1(%arg0: i32) -> (i32, i32) {
    %c0_i32 = arith.constant 0 : i32
    %c0_i32_0 = arith.constant 0 : i32
    %c0_i32_1 = arith.constant 0 : i32
    return %c0_i32, %c0_i32_0 : i32, i32
  }
  func.func @transform_2(%arg0: i32) -> (i32, i32) {
    %c0_i32 = arith.constant 0 : i32
    %c0_i32_0 = arith.constant 0 : i32
    %c0_i32_1 = arith.constant 0 : i32
    return %c0_i32, %c0_i32_0 : i32, i32
  }
  func.func @transform_3(%arg0: i32) -> (i32, i32) {
    %c0_i32 = arith.constant 0 : i32
    %c0_i32_0 = arith.constant 0 : i32
    return %arg0, %c0_i32 : i32, i32
  }
}

</mosaic_0001>

<llo_original>
// kernel: tpu_custom_call.1
$region0: #{tpu_custom_call.1}
  #allocation0 [shape = 'u32[]', space=smem, size = 0x4, offset = 0x4, fixed_abs, tag = 'smem constant byte address 0x4 - core index']
  #allocation1 [shape = 'u32[144,128]{1,0:T(1,128)}', space=vmem, size = 0x12000, scoped, tag = 'internal scratch']
  %s0 = inlined_call_operand.hbm [shape: f32[8,128], index: 0, kind: input, shape index: {}]
  %s1 = inlined_call_operand.hbm [shape: f32[128,128], index: 1, kind: input, shape index: {}]
  %s2 = inlined_call_operand.vmem [shape: f32[1,128], index: 2, kind: input, shape index: {}]
  %s3 = inlined_call_operand.hbm [shape: f32[8,128], index: 3, kind: output, shape index: {}]
  %s4 = sld [smem:[#allocation0]]
  $region30: #{tpu_custom_call.1} parent=0
    _
  %s6 = ssub.s32 1, %s4
  %s7 = scalar_select 0, %s6, %s4
  $region1: #{tpu_custom_call.1} parent=0
    #allocation2 [shape = 'u8[4096]{0}', space=vmem, size = 0x1000, scoped, tag = 'input window, operand 0, single buffered']
    #allocation3 [shape = 's32[1]{0}', space=sflag, size = 0x4, scoped, tag = 'scoped memory for tpu_custom_call.1']
    #allocation4 [shape = 's32[1]{0}', space=sflag, size = 0x4, scoped, tag = 'scoped memory for tpu_custom_call.1']
    #allocation5 [shape = 'u8[65536]{0}', space=vmem, size = 0x10000, scoped, tag = 'input window, operand 1, single buffered']
    #allocation6 [shape = 's32[1]{0}', space=sflag, size = 0x4, scoped, tag = 'scoped memory for tpu_custom_call.1']
    #allocation7 [shape = 'u8[4096]{0}', space=vmem, size = 0x1000, scoped, tag = 'output window, operand 0, single buffered']
    %8 = vsyncpa [#allocation3], 0
    %9 = vsyncpa [#allocation6], 0
    %10 = vsyncpa [#allocation4], 0
    // Predicated region
    $region2: #{tpu_custom_call.1} parent=1 // pred_check
      _
    $region3: #{tpu_custom_call.1} parent=1 // pred_check_branch
      %12 = sbr.rel (0) target = $region5
    $region4: #{tpu_custom_call.1} parent=1 // pred_region
      %s14 = ssub.s32 128, 128
      %15 = vsyncadd [#allocation3], %s14
      %s17 = sshll.u32 [#allocation2], 4
      %s18 = int_to_ptr.vmem [resolvable:$true] %s17
      %20 = dma.hbm_to_vmem [thread:$0]  %s0, 128, %s18, [#allocation3]
    $region5: #{tpu_custom_call.1} parent=1 // pred_fallthru
      _
    // Predicated region
    $region6: #{tpu_custom_call.1} parent=1 // pred_check
      _
    $region7: #{tpu_custom_call.1} parent=1 // pred_check_branch
      %22 = sbr.rel (0) target = $region9
    $region8: #{tpu_custom_call.1} parent=1 // pred_region
      %s24 = ssub.s32 2048, 2048
      %25 = vsyncadd [#allocation6], %s24
      %s26 = sshll.u32 [#allocation5], 4
      %s27 = int_to_ptr.vmem [resolvable:$true] %s26
      %32 = dma.hbm_to_vmem [thread:$0]  %s1, 2048, %s27, [#allocation6], 128, 128, 8
    $region9: #{tpu_custom_call.1} parent=1 // pred_fallthru
      _
    // Predicated region
    $region10: #{tpu_custom_call.1} parent=1 // pred_check
      _
    $region11: #{tpu_custom_call.1} parent=1 // pred_check_branch
      %34 = sbr.rel (0) target = $region13
    $region12: #{tpu_custom_call.1} parent=1 // pred_region
      _
    $region13: #{tpu_custom_call.1} parent=1 // pred_fallthru
      _
    // Predicated region
    $region14: #{tpu_custom_call.1} parent=1 // pred_check
      _
    $region15: #{tpu_custom_call.1} parent=1 // pred_check_branch
      %36 = sbr.rel (0) target = $region17
    $region16: #{tpu_custom_call.1} parent=1 // pred_region
      %37 = dma.done [#allocation3], 128
    $region17: #{tpu_custom_call.1} parent=1 // pred_fallthru
      _
    // Predicated region
    $region18: #{tpu_custom_call.1} parent=1 // pred_check
      _
    $region19: #{tpu_custom_call.1} parent=1 // pred_check_branch
      %39 = sbr.rel (0) target = $region21
    $region20: #{tpu_custom_call.1} parent=1 // pred_region
      %40 = dma.done [#allocation6], 2048
    $region21: #{tpu_custom_call.1} parent=1 // pred_fallthru
      _
    %v41 = vld [vmem:[#allocation2] sm:$0xff]
    %v42 = vld [vmem:[#allocation5] sm:$0xff]
    %v43 = vld [vmem:[#allocation5 + $0x8] sm:$0xff]
    %v44 = vld [vmem:[#allocation5 + $0x10] sm:$0xff]
    %v45 = vld [vmem:[#allocation5 + $0x18] sm:$0xff]
    %v46 = vld [vmem:[#allocation5 + $0x20] sm:$0xff]
    %v47 = vld [vmem:[#allocation5 + $0x28] sm:$0xff]
    %v48 = vld [vmem:[#allocation5 + $0x30] sm:$0xff]
    %v49 = vld [vmem:[#allocation5 + $0x38] sm:$0xff]
    %v50 = vld [vmem:[#allocation5 + $0x40] sm:$0xff]
    %v51 = vld [vmem:[#allocation5 + $0x48] sm:$0xff]
    %v52 = vld [vmem:[#allocation5 + $0x50] sm:$0xff]
    %v53 = vld [vmem:[#allocation5 + $0x58] sm:$0xff]
    %v54 = vld [vmem:[#allocation5 + $0x60] sm:$0xff]
    %v55 = vld [vmem:[#allocation5 + $0x68] sm:$0xff]
    %v56 = vld [vmem:[#allocation5 + $0x70] sm:$0xff]
    %v57 = vld [vmem:[#allocation5 + $0x78] sm:$0xff]
    %v58 = vld [vmem:[%s2] sm:$0x1]
    %v60 = vlaneseq
    %v61 = vshrl.u32 %v60, 7
    %v62 = vsub.s32 0, %v61
    %v63 = vrot.slane %v58, %v62
    %65 = vmatprep.subr.mxu0 0.0
    %66 = vmatpush1.msra.mxu0 %v42
    %67 = vmatprep.subr.mxu0 0.0
    %68 = vmatpush1.msra.mxu0 %v43
    %69 = vmatprep.subr.mxu0 0.0
    %70 = vmatpush1.msra.mxu0 %v44
    %71 = vmatprep.subr.mxu0 0.0
    %72 = vmatpush1.msra.mxu0 %v45
    %73 = vmatprep.subr.mxu0 0.0
    %74 = vmatpush1.msra.mxu0 %v46
    %75 = vmatprep.subr.mxu0 0.0
    %76 = vmatpush1.msra.mxu0 %v47
    %77 = vmatprep.subr.mxu0 0.0
    %78 = vmatpush1.msra.mxu0 %v48
    %79 = vmatprep.subr.mxu0 0.0
    %80 = vmatpush1.msra.mxu0 %v49
    %81 = vmatprep.subr.mxu0 0.0
    %82 = vmatpush1.msra.mxu0 %v50
    %83 = vmatprep.subr.mxu0 0.0
    %84 = vmatpush1.msra.mxu0 %v51
    %85 = vmatprep.subr.mxu0 0.0
    %86 = vmatpush1.msra.mxu0 %v52
    %87 = vmatprep.subr.mxu0 0.0
    %88 = vmatpush1.msra.mxu0 %v53
    %89 = vmatprep.subr.mxu0 0.0
    %90 = vmatpush1.msra.mxu0 %v54
    %91 = vmatprep.subr.mxu0 0.0
    %92 = vmatpush1.msra.mxu0 %v55
    %93 = vmatprep.subr.mxu0 0.0
    %94 = vmatpush1.msra.mxu0 %v56
    %95 = vmatprep.subr.mxu0 0.0
    %96 = vmatpush1.msra.mxu0 %v57
    %97 = vmatprep.subr.mxu0 0.0
    %98 = vmatpush1.msra.mxu0 0.0
    %99 = vmatprep.subr.mxu0 0.0
    %100 = vmatpush1.msra.mxu0 0.0
    %101 = vmatprep.subr.mxu0 0.0
    %102 = vmatpush1.msra.mxu0 0.0
    %103 = vmatprep.subr.mxu0 0.0
    %104 = vmatpush1.msra.mxu0 0.0
    %105 = vmatprep.subr.mxu0 0.0
    %106 = vmatpush1.msra.mxu0 0.0
    %107 = vmatprep.subr.mxu0 0.0
    %108 = vmatpush1.msra.mxu0 0.0
    %109 = vmatprep.subr.mxu0 0.0
    %110 = vmatpush1.msra.mxu0 0.0
    %111 = vmatprep.subr.mxu0 0.0
    %112 = vmatpush1.msra.mxu0 0.0
    %113 = vmatprep.subr.mxu0 0.0
    %114 = vmatpush1.msra.mxu0 0.0
    %115 = vmatprep.subr.mxu0 0.0
    %116 = vmatpush1.msra.mxu0 0.0
    %117 = vmatprep.subr.mxu0 0.0
    %118 = vmatpush1.msra.mxu0 0.0
    %119 = vmatprep.subr.mxu0 0.0
    %120 = vmatpush1.msra.mxu0 0.0
    %121 = vmatprep.subr.mxu0 0.0
    %122 = vmatpush1.msra.mxu0 0.0
    %123 = vmatprep.subr.mxu0 0.0
    %124 = vmatpush1.msra.mxu0 0.0
    %125 = vmatprep.subr.mxu0 0.0
    %126 = vmatpush1.msra.mxu0 0.0
    %127 = vmatprep.subr.mxu0 0.0
    %128 = vmatpush1.msra.mxu0 0.0
    %129 = vmatprep.mubr.f32.mxu0 0.0
    %130 = vmatmul.mubr.f32.gmra.mrb[0].mxu0 %v41
    %v131 = vpop.f32.mrb[0].mxu0
    %v132 = vadd.f32 %v63, %v131
    %v133 = vpop.f32.mrb[0].mxu0
    %134 = vdwg.mxu0
    %135 = vst [vmem:[#allocation7] sm:$0xff] %v132
    // Predicated region
    $region22: #{tpu_custom_call.1} parent=1 // pred_check
      _
    $region23: #{tpu_custom_call.1} parent=1 // pred_check_branch
      %137 = sbr.rel (0) target = $region25
    $region24: #{tpu_custom_call.1} parent=1 // pred_region
      %s139 = ssub.s32 128, 128
      %140 = vsyncadd [#allocation4], %s139
      %s142 = sshll.u32 [#allocation7], 4
      %s143 = int_to_ptr.vmem [resolvable:$true] %s142
      %145 = dma.vmem_to_hbm [thread:$0]  %s143, 128, %s3, [#allocation4]
    $region25: #{tpu_custom_call.1} parent=1 // pred_fallthru
      _
    // Predicated region
    $region26: #{tpu_custom_call.1} parent=1 // pred_check
      _
    $region27: #{tpu_custom_call.1} parent=1 // pred_check_branch
      %147 = sbr.rel (0) target = $region29
    $region28: #{tpu_custom_call.1} parent=1 // pred_region
      %148 = dma.done [#allocation4], 128
    $region29: #{tpu_custom_call.1} parent=1 // pred_fallthru
      _
    %149 = vsyncpa [#allocation3], 1
    %150 = vsyncpa [#allocation6], 1
    %151 = vsyncpa [#allocation4], 1

</llo_original>
